<compile_context>
chip_gen: v7x
topology: tpu7x:2x2x1
jax: 0.10.0
libtpu: 0.0.40
codegen_flags: <defaults>
</compile_context>

<pallas_src>
import functools
import math

import numpy as np
import jax
import jax.numpy as jnp
from jax import lax
from jax.experimental import pallas as pl
from jax.experimental.pallas import tpu as pltpu

EDGES = ((1, 0, 0), (0, 1, 0), (0, 0, 1))
ALPHA = 0.5
BETA = 0.5

# Per grid step we hold (pred 3ch + labels + masks) double-buffered
# => ~40 bytes per tile element.  Keep TILE_H * C <= ~300K f32 elements so the
# footprint stays ~12 MiB (under v5e's 16 MiB default scoped-VMEM budget and
# well under v7x's 64 MiB physical VMEM).
_MAX_TILE_ELEMS = 300_000


def _choose_tile_h(H, C):
    """Largest H-tile (multiple of 8, or full H) that fits the VMEM budget."""
    if H * C <= _MAX_TILE_ELEMS:
        return H
    th = (_MAX_TILE_ELEMS // C) // 8 * 8
    th = max(8, th)
    return min(th, H)


# ------------------------------ Pallas kernel ------------------------------ #
def _affinity_loss_kernel(p_ref, lab_ref, msk_ref, out_ref,
                          lab_carry_ref, msk_carry_ref,
                          *, edges, alpha, tile_h, acc_r, H, W, D):
    """Fused per-(example, H-tile) step: for every edge, build shifted label /
    mask neighbours in-kernel, compute BCE-with-logits, apply the supervoxel
    weighting and accumulate into a resident per-example (E, acc_r, C) block."""
    t = pl.program_id(1)
    C = W * D

    @pl.when(t == 0)
    def _init():
        out_ref[...] = jnp.zeros_like(out_ref)

    lab = lab_ref[0]                       # (tile_h, C) int32
    msk = msk_ref[0]                       # (tile_h, C) float32

    # Row carried in from the previous H-tile of the same example.  On the
    # first tile it is garbage, but every use of it is masked (h == 0 is
    # invalid for any edge that needs the carry).
    prev_lab = lab_carry_ref[...]          # (1, C)
    prev_msk = msk_carry_ref[...]          # (1, C)

    row = lax.broadcasted_iota(jnp.int32, (tile_h, C), 0)
    col = lax.broadcasted_iota(jnp.int32, (tile_h, C), 1)
    h_idx = t * tile_h + row               # global H index
    dmod = col % D                         # d index inside the merged W*D axis
    in_vol = h_idx < H                     # masks the ragged last H-tile

    one_m_alpha = jnp.float32(1.0 - alpha)

    for j, e in enumerate(edges):
        eh, ew, ed = int(e[0]), int(e[1]), int(e[2])
        o1 = (max(eh, 0), max(ew, 0), max(ed, 0))
        o2 = (max(-eh, 0), max(-ew, 0), max(-ed, 0))

        # Neighbour values at (v - e): backward H shift (carry) + lane roll.
        l2, m2 = lab, msk
        if eh == 1:
            l2 = jnp.concatenate([prev_lab, l2[:tile_h - 1, :]], axis=0)
            m2 = jnp.concatenate([prev_msk, m2[:tile_h - 1, :]], axis=0)
        s = ew * D + ed
        if s != 0:
            l2 = jnp.roll(l2, s, axis=1)
            m2 = jnp.roll(m2, s, axis=1)

        # Validity of base voxel v: o1 <= v < shape - o2 per axis (only the
        # statically non-trivial comparisons are emitted).
        valid = in_vol
        if o1[0] > 0:
            valid = valid & (h_idx >= o1[0])
        if o2[0] > 0:
            valid = valid & (h_idx < H - o2[0])
        if o1[1] > 0:
            valid = valid & (col >= o1[1] * D)
        if o2[1] > 0:
            valid = valid & (col < (W - o2[1]) * D)
        if o1[2] > 0:
            valid = valid & (dmod >= o1[2])
        if o2[2] > 0:
            valid = valid & (dmod < D - o2[2])

        x = p_ref[0, j]                    # (tile_h, C) logits
        target = (lab == l2) & (lab != 0)
        crit = (msk == m2) & (msk != 0.0)

        # BCEWithLogitsLoss(reduction='none'), z in {0,1}:
        #   max(x,0) - x*z + log1p(exp(-|x|))
        bce = (jnp.maximum(x, 0.0) - jnp.where(target, x, 0.0)
               + jnp.log1p(jnp.exp(-jnp.abs(x))))
        # (1-alpha)*bce + alpha*crit*bce == bce * ((1-alpha) + alpha*crit)
        weight = jnp.where(crit, jnp.float32(1.0), one_m_alpha)
        contrib = jnp.where(valid, bce * weight, 0.0)

        # Sublane/lane-aligned accumulation: a pure vreg-wise VPU add per step
        # (no per-step cross-lane reduce); final collapse is in the wrapper.
        out_ref[0, j] += contrib.reshape(tile_h // acc_r, acc_r, C).sum(axis=0)

    # Carry this tile's last labels/masks row to the next H-tile.
    lab_carry_ref[...] = lab[tile_h - 1:, :]
    msk_carry_ref[...] = msk[tile_h - 1:, :]


# -------------------------------- wrapper ---------------------------------- #
def supervoxel_affinity_loss(pred_affs, target_labels, critical_masks,
                             edges=EDGES, alpha=ALPHA):
    """Forward pass of SuperVoxelAffinityLoss (critical_masks supplied)."""
    pred_affs = jnp.asarray(pred_affs, jnp.float32)
    B, E, H, W, D = pred_affs.shape
    edges = tuple(tuple(int(v) for v in e) for e in edges)
    if E != len(edges):
        raise ValueError("pred_affs channel count must equal len(edges)")
    for e in edges:
        if e == (0, 0, 0) or abs(e[1]) >= W or abs(e[2]) >= D:
            raise ValueError(f"unsupported edge {e}")
        if e[0] not in (0, 1):
            # TODO(synk): edges with |e_h| > 1 or e_h < 0 would need a deeper /
            # forward row carry; only e_h in {0, 1} is implemented.
            raise ValueError(f"edge {e}: only e[0] in (0, 1) supported")

    C = W * D
    # Free (metadata-only) reshapes: merge W and D into the lane axis.
    pred_r = pred_affs.reshape(B, E, H, C)
    labels_r = jnp.asarray(target_labels).astype(jnp.int32).reshape(B, H, C)
    masks_r = jnp.asarray(critical_masks, jnp.float32).reshape(B, H, C)

    tile_h = _choose_tile_h(H, C)
    acc_r = math.gcd(tile_h, 8)
    n_t = pl.cdiv(H, tile_h)

    kernel = functools.partial(
        _affinity_loss_kernel, edges=edges, alpha=float(alpha),
        tile_h=tile_h, acc_r=acc_r, H=H, W=W, D=D)

    n_elems = B * E * H * C
    cost = pl.CostEstimate(
        flops=int(14 * n_elems),
        transcendentals=int(2 * n_elems),
        bytes_accessed=int(4 * (pred_r.size + labels_r.size + masks_r.size
                                + B * E * acc_r * C)),
    )

    partial = pl.pallas_call(
        kernel,
        out_shape=jax.ShapeDtypeStruct((B, E, acc_r, C), jnp.float32),
        grid_spec=pltpu.PrefetchScalarGridSpec(
            num_scalar_prefetch=0,
            grid=(B, n_t),
            in_specs=[
                pl.BlockSpec((1, E, tile_h, C), lambda b, t: (b, 0, t, 0)),
                pl.BlockSpec((1, tile_h, C), lambda b, t: (b, t, 0)),
                pl.BlockSpec((1, tile_h, C), lambda b, t: (b, t, 0)),
            ],
            out_specs=pl.BlockSpec((1, E, acc_r, C), lambda b, t: (b, 0, 0, 0)),
            scratch_shapes=[
                pltpu.VMEM((1, C), jnp.int32),    # labels row carry
                pltpu.VMEM((1, C), jnp.float32),  # masks row carry
            ],
        ),
        compiler_params=pltpu.CompilerParams(
            dimension_semantics=("parallel", "arbitrary")),
        cost_estimate=cost,
    )(pred_r, labels_r, masks_r)

    # sum_i mean_i per edge: collapse the per-example accumulators and divide
    # by the per-edge cropped voxel count.
    per_example_edge = jnp.sum(partial, axis=(2, 3))                 # (B, E)
    n_per_edge = jnp.asarray(
        [(H - abs(e[0])) * (W - abs(e[1])) * (D - abs(e[2])) for e in edges],
        jnp.float32)
    return jnp.sum(per_example_edge / n_per_edge[None, :])


# ----------------------- pure-JAX reference (check) ------------------------ #
def _crop_pair(x, edge):
    H, W, D = x.shape[-3:]
    e = np.asarray(edge)
    o1 = np.maximum(e, 0)
    o2 = np.maximum(-e, 0)
    x1 = x[..., o1[0]:H - o2[0], o1[1]:W - o2[1], o1[2]:D - o2[2]]
    x2 = x[..., o2[0]:H - o1[0], o2[1]:W - o1[1], o2[2]:D - o1[2]]
    return x1, x2


def _reference_loss(pred_affs, target_labels, critical_masks,
                    edges=EDGES, alpha=ALPHA):
    def bce(x, z):
        return jnp.maximum(x, 0.0) - x * z + jnp.log1p(jnp.exp(-jnp.abs(x)))

    loss = 0.0
    for i in range(pred_affs.shape[0]):
        for j, edge in enumerate(edges):
            p1, _ = _crop_pair(pred_affs[i, j], edge)
            t1, t2 = _crop_pair(target_labels[i], edge)
            m1, m2 = _crop_pair(critical_masks[i], edge)
            taff = ((t1 == t2) & (t1 != 0)).astype(jnp.float32)
            caff = ((m1 == m2) & (m1 != 0)).astype(jnp.float32)
            l = bce(p1, taff)
            loss = loss + ((1.0 - alpha) * l + alpha * caff * l).mean()
    return loss


if __name__ == "__main__":
    key = jax.random.PRNGKey(0)
    B, E, H, W, D = 2, len(EDGES), 16, 16, 16
    k1, k2 = jax.random.split(key)

    pred_affs = jax.random.normal(k1, (B, E, H, W, D), dtype=jnp.float32)
    target_labels = jax.random.randint(k2, (B, H, W, D), 0, 5, dtype=jnp.int32)

    # TODO(synk): run_watershed (affinity decoding) and detect_critical
    # (critical-component detection) are external CPU graph algorithms with no
    # Pallas equivalent; a deterministic synthetic critical mask stands in.
    critical_masks = BETA * (target_labels > 0).astype(jnp.float32)

    loss = supervoxel_affinity_loss(pred_affs, target_labels, critical_masks)
    jax.block_until_ready(loss)

    ref = _reference_loss(pred_affs, target_labels, critical_masks)
    np.testing.assert_allclose(np.asarray(loss), np.asarray(ref),
                               rtol=2e-4, atol=2e-4)

    print("KERNEL_OK")
</pallas_src>

<mosaic_0001>
module attributes {stable_mosaic.version = 11 : i64} {
  func.func @_affinity_loss_kernel(%arg0: i32, %arg1: i32, %arg2: memref<1x3x16x256xf32, #tpu.memory_space<vmem>>, %arg3: memref<1x16x256xi32, #tpu.memory_space<vmem>>, %arg4: memref<1x16x256xf32, #tpu.memory_space<vmem>>, %arg5: memref<1x3x8x256xf32, #tpu.memory_space<vmem>>, %arg6: memref<1x256xi32, #tpu.memory_space<vmem>>, %arg7: memref<1x256xf32, #tpu.memory_space<vmem>>) attributes {dimension_semantics = [#tpu.dimension_semantics<parallel>, #tpu.dimension_semantics<arbitrary>], iteration_bounds = array<i64: 2, 1>, scalar_prefetch = 0 : i64, scratch_operands = 2 : i64, tpu.core_type = #tpu.core_type<tc>, window_params = [{transform_indices = @transform_0, window_bounds = array<i64: 1, 3, 16, 256>}, {transform_indices = @transform_1, window_bounds = array<i64: 1, 16, 256>}, {transform_indices = @transform_2, window_bounds = array<i64: 1, 16, 256>}, {transform_indices = @transform_3, window_bounds = array<i64: 1, 3, 8, 256>}]} {
    %c0_i32 = arith.constant 0 : i32
    %0 = arith.cmpi eq, %arg1, %c0_i32 : i32
    %1 = arith.extui %0 : i1 to i32
    %c0_i32_0 = arith.constant 0 : i32
    %2 = arith.cmpi ne, %1, %c0_i32_0 : i32
    scf.if %2 {
      %cst_83 = arith.constant 0.000000e+00 : f32
      %166 = vector.broadcast %cst_83 : f32 to vector<1x3x8x256xf32>
      %c0_84 = arith.constant 0 : index
      %c0_85 = arith.constant 0 : index
      %c0_86 = arith.constant 0 : index
      %c0_87 = arith.constant 0 : index
      %167 = vector.load %arg5[%c0_84, %c0_85, %c0_86, %c0_87] : memref<1x3x8x256xf32, #tpu.memory_space<vmem>>, vector<1x3x8x256xf32>
      tpu.vector_store %arg5[%c0_84, %c0_85, %c0_86, %c0_87], %166 {strides = array<i32>} : memref<1x3x8x256xf32, #tpu.memory_space<vmem>>, vector<1x3x8x256xf32>,
    } else {
    }
    %c0 = arith.constant 0 : index
    %c0_1 = arith.constant 0 : index
    %c0_2 = arith.constant 0 : index
    %3 = vector.load %arg3[%c0, %c0_1, %c0_2] : memref<1x16x256xi32, #tpu.memory_space<vmem>>, vector<1x16x256xi32>
    %4 = vector.shape_cast %3 : vector<1x16x256xi32> to vector<16x256xi32>
    %c0_3 = arith.constant 0 : index
    %c0_4 = arith.constant 0 : index
    %c0_5 = arith.constant 0 : index
    %5 = vector.load %arg4[%c0_3, %c0_4, %c0_5] : memref<1x16x256xf32, #tpu.memory_space<vmem>>, vector<1x16x256xf32>
    %6 = vector.shape_cast %5 : vector<1x16x256xf32> to vector<16x256xf32>
    %c0_6 = arith.constant 0 : index
    %c0_7 = arith.constant 0 : index
    %7 = vector.load %arg6[%c0_6, %c0_7] : memref<1x256xi32, #tpu.memory_space<vmem>>, vector<1x256xi32>
    %c0_8 = arith.constant 0 : index
    %c0_9 = arith.constant 0 : index
    %8 = vector.load %arg7[%c0_8, %c0_9] : memref<1x256xf32, #tpu.memory_space<vmem>>, vector<1x256xf32>
    %9 = tpu.iota {dimensions = array<i32: 0>} : vector<16x256xi32>
    %10 = tpu.iota {dimensions = array<i32: 1>} : vector<16x256xi32>
    %c16_i32 = arith.constant 16 : i32
    %11 = arith.muli %arg1, %c16_i32 : i32
    %12 = vector.broadcast %11 : i32 to vector<16x256xi32>
    %13 = arith.addi %12, %9 : vector<16x256xi32>
    %c16_i32_10 = arith.constant 16 : i32
    %c0_i32_11 = arith.constant 0 : i32
    %14 = arith.cmpi eq, %c16_i32_10, %c0_i32_11 : i32
    %c1_i32 = arith.constant 1 : i32
    %15 = arith.select %14, %c1_i32, %c16_i32_10 : i32
    %16 = vector.broadcast %15 : i32 to vector<16x256xi32>
    %17 = arith.remsi %10, %16 : vector<16x256xi32>
    %c0_i32_12 = arith.constant 0 : i32
    %18 = vector.broadcast %c0_i32_12 : i32 to vector<16x256xi32>
    %19 = arith.cmpi ne, %17, %18 : vector<16x256xi32>
    %c0_i32_13 = arith.constant 0 : i32
    %20 = vector.broadcast %c0_i32_13 : i32 to vector<16x256xi32>
    %21 = arith.cmpi slt, %17, %20 : vector<16x256xi32>
    %c0_i32_14 = arith.constant 0 : i32
    %22 = arith.cmpi slt, %15, %c0_i32_14 : i32
    %23 = vector.broadcast %22 : i1 to vector<16x256xi1>
    %24 = vector.broadcast %23 : vector<16x256xi1> to vector<16x256xi1>
    %25 = arith.xori %21, %24 : vector<16x256xi1>
    %26 = arith.andi %25, %19 : vector<16x256xi1>
    %27 = vector.broadcast %15 : i32 to vector<16x256xi32>
    %28 = arith.addi %17, %27 : vector<16x256xi32>
    %29 = arith.select %26, %28, %17 : vector<16x256xi1>, vector<16x256xi32>
    %c16_i32_15 = arith.constant 16 : i32
    %30 = vector.broadcast %c16_i32_15 : i32 to vector<16x256xi32>
    %31 = arith.cmpi slt, %13, %30 : vector<16x256xi32>
    %32 = vector.extract_strided_slice %4 {offsets = [0, 0], sizes = [15, 256], strides = [1, 1]} : vector<16x256xi32> to vector<15x256xi32>
    %33 = tpu.concatenate %7, %32 in 0 : vector<1x256xi32>, vector<15x256xi32> -> vector<16x256xi32>
    %34 = vector.extract_strided_slice %6 {offsets = [0, 0], sizes = [15, 256], strides = [1, 1]} : vector<16x256xf32> to vector<15x256xf32>
    %35 = tpu.concatenate %8, %34 in 0 : vector<1x256xf32>, vector<15x256xf32> -> vector<16x256xf32>
    %c1_i32_16 = arith.constant 1 : i32
    %36 = vector.broadcast %c1_i32_16 : i32 to vector<16x256xi32>
    %37 = arith.cmpi sge, %13, %36 : vector<16x256xi32>
    %38 = arith.andi %31, %37 : vector<16x256xi1>
    %c0_17 = arith.constant 0 : index
    %c0_18 = arith.constant 0 : index
    %c0_19 = arith.constant 0 : index
    %c0_20 = arith.constant 0 : index
    %39 = vector.load %arg2[%c0_17, %c0_18, %c0_19, %c0_20] : memref<1x3x16x256xf32, #tpu.memory_space<vmem>>, vector<1x1x16x256xf32>
    %40 = vector.shape_cast %39 : vector<1x1x16x256xf32> to vector<16x256xf32>
    %41 = arith.cmpi eq, %4, %33 : vector<16x256xi32>
    %c0_i32_21 = arith.constant 0 : i32
    %42 = vector.broadcast %c0_i32_21 : i32 to vector<16x256xi32>
    %43 = arith.cmpi ne, %4, %42 : vector<16x256xi32>
    %44 = arith.andi %41, %43 : vector<16x256xi1>
    %45 = arith.cmpf oeq, %6, %35 : vector<16x256xf32>
    %cst = arith.constant 0.000000e+00 : f32
    %46 = vector.broadcast %cst : f32 to vector<16x256xf32>
    %47 = arith.cmpf one, %6, %46 : vector<16x256xf32>
    %48 = arith.andi %45, %47 : vector<16x256xi1>
    %cst_22 = arith.constant 0.000000e+00 : f32
    %49 = vector.broadcast %cst_22 : f32 to vector<16x256xf32>
    %50 = arith.maximumf %40, %49 : vector<16x256xf32>
    %cst_23 = arith.constant 0.000000e+00 : f32
    %51 = vector.broadcast %cst_23 : f32 to vector<16x256xf32>
    %52 = arith.select %44, %40, %51 : vector<16x256xi1>, vector<16x256xf32>
    %53 = arith.subf %50, %52 : vector<16x256xf32>
    %54 = math.absf %40 : vector<16x256xf32>
    %cst_24 = arith.constant 0.000000e+00 : f32
    %55 = vector.broadcast %cst_24 : f32 to vector<16x256xf32>
    %56 = arith.subf %55, %54 : vector<16x256xf32>
    %57 = math.exp %56 : vector<16x256xf32>
    %58 = math.log1p %57 : vector<16x256xf32>
    %59 = arith.addf %53, %58 : vector<16x256xf32>
    %cst_25 = arith.constant 1.000000e+00 : f32
    %cst_26 = arith.constant 5.000000e-01 : f32
    %60 = vector.broadcast %cst_25 : f32 to vector<16x256xf32>
    %61 = vector.broadcast %cst_26 : f32 to vector<16x256xf32>
    %62 = arith.select %48, %60, %61 : vector<16x256xi1>, vector<16x256xf32>
    %63 = arith.mulf %59, %62 : vector<16x256xf32>
    %cst_27 = arith.constant 0.000000e+00 : f32
    %64 = vector.broadcast %cst_27 : f32 to vector<16x256xf32>
    %65 = arith.select %38, %63, %64 : vector<16x256xi1>, vector<16x256xf32>
    %c0_28 = arith.constant 0 : index
    %c0_29 = arith.constant 0 : index
    %c0_30 = arith.constant 0 : index
    %c0_31 = arith.constant 0 : index
    %66 = vector.load %arg5[%c0_28, %c0_29, %c0_30, %c0_31] : memref<1x3x8x256xf32, #tpu.memory_space<vmem>>, vector<1x1x8x256xf32>
    %67 = vector.shape_cast %66 : vector<1x1x8x256xf32> to vector<8x256xf32>
    %68 = vector.shape_cast %65 : vector<16x256xf32> to vector<2x8x256xf32>
    %cst_32 = arith.constant dense<0.000000e+00> : vector<8x256xf32>
    %69 = vector.multi_reduction <add>, %68, %cst_32 [0] : vector<2x8x256xf32> to vector<8x256xf32>
    %70 = arith.addf %67, %69 : vector<8x256xf32>
    %c0_33 = arith.constant 0 : index
    %c0_34 = arith.constant 0 : index
    %c0_35 = arith.constant 0 : index
    %c0_36 = arith.constant 0 : index
    %71 = vector.load %arg5[%c0_33, %c0_34, %c0_35, %c0_36] : memref<1x3x8x256xf32, #tpu.memory_space<vmem>>, vector<1x1x8x256xf32>
    %72 = vector.shape_cast %71 : vector<1x1x8x256xf32> to vector<8x256xf32>
    %73 = vector.shape_cast %70 : vector<8x256xf32> to vector<1x1x8x256xf32>
    tpu.vector_store %arg5[%c0_33, %c0_34, %c0_35, %c0_36], %73 {strides = array<i32>} : memref<1x3x8x256xf32, #tpu.memory_space<vmem>>, vector<1x1x8x256xf32>,
    %74 = vector.extract_strided_slice %4 {offsets = [0, 240], sizes = [16, 16], strides = [1, 1]} : vector<16x256xi32> to vector<16x16xi32>
    %75 = vector.extract_strided_slice %4 {offsets = [0, 0], sizes = [16, 240], strides = [1, 1]} : vector<16x256xi32> to vector<16x240xi32>
    %76 = tpu.concatenate %74, %75 in 1 : vector<16x16xi32>, vector<16x240xi32> -> vector<16x256xi32>
    %77 = vector.extract_strided_slice %6 {offsets = [0, 240], sizes = [16, 16], strides = [1, 1]} : vector<16x256xf32> to vector<16x16xf32>
    %78 = vector.extract_strided_slice %6 {offsets = [0, 0], sizes = [16, 240], strides = [1, 1]} : vector<16x256xf32> to vector<16x240xf32>
    %79 = tpu.concatenate %77, %78 in 1 : vector<16x16xf32>, vector<16x240xf32> -> vector<16x256xf32>
    %c16_i32_37 = arith.constant 16 : i32
    %80 = vector.broadcast %c16_i32_37 : i32 to vector<16x256xi32>
    %81 = arith.cmpi sge, %10, %80 : vector<16x256xi32>
    %82 = arith.andi %31, %81 : vector<16x256xi1>
    %c0_38 = arith.constant 0 : index
    %c1 = arith.constant 1 : index
    %c0_39 = arith.constant 0 : index
    %c0_40 = arith.constant 0 : index
    %83 = vector.load %arg2[%c0_38, %c1, %c0_39, %c0_40] : memref<1x3x16x256xf32, #tpu.memory_space<vmem>>, vector<1x1x16x256xf32>
    %84 = vector.shape_cast %83 : vector<1x1x16x256xf32> to vector<16x256xf32>
    %85 = arith.cmpi eq, %4, %76 : vector<16x256xi32>
    %c0_i32_41 = arith.constant 0 : i32
    %86 = vector.broadcast %c0_i32_41 : i32 to vector<16x256xi32>
    %87 = arith.cmpi ne, %4, %86 : vector<16x256xi32>
    %88 = arith.andi %85, %87 : vector<16x256xi1>
    %89 = arith.cmpf oeq, %6, %79 : vector<16x256xf32>
    %cst_42 = arith.constant 0.000000e+00 : f32
    %90 = vector.broadcast %cst_42 : f32 to vector<16x256xf32>
    %91 = arith.cmpf one, %6, %90 : vector<16x256xf32>
    %92 = arith.andi %89, %91 : vector<16x256xi1>
    %cst_43 = arith.constant 0.000000e+00 : f32
    %93 = vector.broadcast %cst_43 : f32 to vector<16x256xf32>
    %94 = arith.maximumf %84, %93 : vector<16x256xf32>
    %cst_44 = arith.constant 0.000000e+00 : f32
    %95 = vector.broadcast %cst_44 : f32 to vector<16x256xf32>
    %96 = arith.select %88, %84, %95 : vector<16x256xi1>, vector<16x256xf32>
    %97 = arith.subf %94, %96 : vector<16x256xf32>
    %98 = math.absf %84 : vector<16x256xf32>
    %cst_45 = arith.constant 0.000000e+00 : f32
    %99 = vector.broadcast %cst_45 : f32 to vector<16x256xf32>
    %100 = arith.subf %99, %98 : vector<16x256xf32>
    %101 = math.exp %100 : vector<16x256xf32>
    %102 = math.log1p %101 : vector<16x256xf32>
    %103 = arith.addf %97, %102 : vector<16x256xf32>
    %cst_46 = arith.constant 1.000000e+00 : f32
    %cst_47 = arith.constant 5.000000e-01 : f32
    %104 = vector.broadcast %cst_46 : f32 to vector<16x256xf32>
    %105 = vector.broadcast %cst_47 : f32 to vector<16x256xf32>
    %106 = arith.select %92, %104, %105 : vector<16x256xi1>, vector<16x256xf32>
    %107 = arith.mulf %103, %106 : vector<16x256xf32>
    %cst_48 = arith.constant 0.000000e+00 : f32
    %108 = vector.broadcast %cst_48 : f32 to vector<16x256xf32>
    %109 = arith.select %82, %107, %108 : vector<16x256xi1>, vector<16x256xf32>
    %c0_49 = arith.constant 0 : index
    %c1_50 = arith.constant 1 : index
    %c0_51 = arith.constant 0 : index
    %c0_52 = arith.constant 0 : index
    %110 = vector.load %arg5[%c0_49, %c1_50, %c0_51, %c0_52] : memref<1x3x8x256xf32, #tpu.memory_space<vmem>>, vector<1x1x8x256xf32>
    %111 = vector.shape_cast %110 : vector<1x1x8x256xf32> to vector<8x256xf32>
    %112 = vector.shape_cast %109 : vector<16x256xf32> to vector<2x8x256xf32>
    %cst_53 = arith.constant dense<0.000000e+00> : vector<8x256xf32>
    %113 = vector.multi_reduction <add>, %112, %cst_53 [0] : vector<2x8x256xf32> to vector<8x256xf32>
    %114 = arith.addf %111, %113 : vector<8x256xf32>
    %c0_54 = arith.constant 0 : index
    %c1_55 = arith.constant 1 : index
    %c0_56 = arith.constant 0 : index
    %c0_57 = arith.constant 0 : index
    %115 = vector.load %arg5[%c0_54, %c1_55, %c0_56, %c0_57] : memref<1x3x8x256xf32, #tpu.memory_space<vmem>>, vector<1x1x8x256xf32>
    %116 = vector.shape_cast %115 : vector<1x1x8x256xf32> to vector<8x256xf32>
    %117 = vector.shape_cast %114 : vector<8x256xf32> to vector<1x1x8x256xf32>
    tpu.vector_store %arg5[%c0_54, %c1_55, %c0_56, %c0_57], %117 {strides = array<i32>} : memref<1x3x8x256xf32, #tpu.memory_space<vmem>>, vector<1x1x8x256xf32>,
    %118 = vector.extract_strided_slice %4 {offsets = [0, 255], sizes = [16, 1], strides = [1, 1]} : vector<16x256xi32> to vector<16x1xi32>
    %119 = vector.extract_strided_slice %4 {offsets = [0, 0], sizes = [16, 255], strides = [1, 1]} : vector<16x256xi32> to vector<16x255xi32>
    %120 = tpu.concatenate %118, %119 in 1 : vector<16x1xi32>, vector<16x255xi32> -> vector<16x256xi32>
    %121 = vector.extract_strided_slice %6 {offsets = [0, 255], sizes = [16, 1], strides = [1, 1]} : vector<16x256xf32> to vector<16x1xf32>
    %122 = vector.extract_strided_slice %6 {offsets = [0, 0], sizes = [16, 255], strides = [1, 1]} : vector<16x256xf32> to vector<16x255xf32>
    %123 = tpu.concatenate %121, %122 in 1 : vector<16x1xf32>, vector<16x255xf32> -> vector<16x256xf32>
    %c1_i32_58 = arith.constant 1 : i32
    %124 = vector.broadcast %c1_i32_58 : i32 to vector<16x256xi32>
    %125 = arith.cmpi sge, %29, %124 : vector<16x256xi32>
    %126 = arith.andi %31, %125 : vector<16x256xi1>
    %c0_59 = arith.constant 0 : index
    %c2 = arith.constant 2 : index
    %c0_60 = arith.constant 0 : index
    %c0_61 = arith.constant 0 : index
    %127 = vector.load %arg2[%c0_59, %c2, %c0_60, %c0_61] : memref<1x3x16x256xf32, #tpu.memory_space<vmem>>, vector<1x1x16x256xf32>
    %128 = vector.shape_cast %127 : vector<1x1x16x256xf32> to vector<16x256xf32>
    %129 = arith.cmpi eq, %4, %120 : vector<16x256xi32>
    %c0_i32_62 = arith.constant 0 : i32
    %130 = vector.broadcast %c0_i32_62 : i32 to vector<16x256xi32>
    %131 = arith.cmpi ne, %4, %130 : vector<16x256xi32>
    %132 = arith.andi %129, %131 : vector<16x256xi1>
    %133 = arith.cmpf oeq, %6, %123 : vector<16x256xf32>
    %cst_63 = arith.constant 0.000000e+00 : f32
    %134 = vector.broadcast %cst_63 : f32 to vector<16x256xf32>
    %135 = arith.cmpf one, %6, %134 : vector<16x256xf32>
    %136 = arith.andi %133, %135 : vector<16x256xi1>
    %cst_64 = arith.constant 0.000000e+00 : f32
    %137 = vector.broadcast %cst_64 : f32 to vector<16x256xf32>
    %138 = arith.maximumf %128, %137 : vector<16x256xf32>
    %cst_65 = arith.constant 0.000000e+00 : f32
    %139 = vector.broadcast %cst_65 : f32 to vector<16x256xf32>
    %140 = arith.select %132, %128, %139 : vector<16x256xi1>, vector<16x256xf32>
    %141 = arith.subf %138, %140 : vector<16x256xf32>
    %142 = math.absf %128 : vector<16x256xf32>
    %cst_66 = arith.constant 0.000000e+00 : f32
    %143 = vector.broadcast %cst_66 : f32 to vector<16x256xf32>
    %144 = arith.subf %143, %142 : vector<16x256xf32>
    %145 = math.exp %144 : vector<16x256xf32>
    %146 = math.log1p %145 : vector<16x256xf32>
    %147 = arith.addf %141, %146 : vector<16x256xf32>
    %cst_67 = arith.constant 1.000000e+00 : f32
    %cst_68 = arith.constant 5.000000e-01 : f32
    %148 = vector.broadcast %cst_67 : f32 to vector<16x256xf32>
    %149 = vector.broadcast %cst_68 : f32 to vector<16x256xf32>
    %150 = arith.select %136, %148, %149 : vector<16x256xi1>, vector<16x256xf32>
    %151 = arith.mulf %147, %150 : vector<16x256xf32>
    %cst_69 = arith.constant 0.000000e+00 : f32
    %152 = vector.broadcast %cst_69 : f32 to vector<16x256xf32>
    %153 = arith.select %126, %151, %152 : vector<16x256xi1>, vector<16x256xf32>
    %c0_70 = arith.constant 0 : index
    %c2_71 = arith.constant 2 : index
    %c0_72 = arith.constant 0 : index
    %c0_73 = arith.constant 0 : index
    %154 = vector.load %arg5[%c0_70, %c2_71, %c0_72, %c0_73] : memref<1x3x8x256xf32, #tpu.memory_space<vmem>>, vector<1x1x8x256xf32>
    %155 = vector.shape_cast %154 : vector<1x1x8x256xf32> to vector<8x256xf32>
    %156 = vector.shape_cast %153 : vector<16x256xf32> to vector<2x8x256xf32>
    %cst_74 = arith.constant dense<0.000000e+00> : vector<8x256xf32>
    %157 = vector.multi_reduction <add>, %156, %cst_74 [0] : vector<2x8x256xf32> to vector<8x256xf32>
    %158 = arith.addf %155, %157 : vector<8x256xf32>
    %c0_75 = arith.constant 0 : index
    %c2_76 = arith.constant 2 : index
    %c0_77 = arith.constant 0 : index
    %c0_78 = arith.constant 0 : index
    %159 = vector.load %arg5[%c0_75, %c2_76, %c0_77, %c0_78] : memref<1x3x8x256xf32, #tpu.memory_space<vmem>>, vector<1x1x8x256xf32>
    %160 = vector.shape_cast %159 : vector<1x1x8x256xf32> to vector<8x256xf32>
    %161 = vector.shape_cast %158 : vector<8x256xf32> to vector<1x1x8x256xf32>
    tpu.vector_store %arg5[%c0_75, %c2_76, %c0_77, %c0_78], %161 {strides = array<i32>} : memref<1x3x8x256xf32, #tpu.memory_space<vmem>>, vector<1x1x8x256xf32>,
    %162 = vector.extract_strided_slice %4 {offsets = [15, 0], sizes = [1, 256], strides = [1, 1]} : vector<16x256xi32> to vector<1x256xi32>
    %c0_79 = arith.constant 0 : index
    %c0_80 = arith.constant 0 : index
    %163 = vector.load %arg6[%c0_79, %c0_80] : memref<1x256xi32, #tpu.memory_space<vmem>>, vector<1x256xi32>
    tpu.vector_store %arg6[%c0_79, %c0_80], %162 {strides = array<i32>} : memref<1x256xi32, #tpu.memory_space<vmem>>, vector<1x256xi32>,
    %164 = vector.extract_strided_slice %6 {offsets = [15, 0], sizes = [1, 256], strides = [1, 1]} : vector<16x256xf32> to vector<1x256xf32>
    %c0_81 = arith.constant 0 : index
    %c0_82 = arith.constant 0 : index
    %165 = vector.load %arg7[%c0_81, %c0_82] : memref<1x256xf32, #tpu.memory_space<vmem>>, vector<1x256xf32>
    tpu.vector_store %arg7[%c0_81, %c0_82], %164 {strides = array<i32>} : memref<1x256xf32, #tpu.memory_space<vmem>>, vector<1x256xf32>,
    return
  }
  func.func @transform_0(%arg0: i32, %arg1: i32) -> (i32, i32, i32, i32) {
    %c0_i32 = arith.constant 0 : i32
    %c0_i32_0 = arith.constant 0 : i32
    %c0_i32_1 = arith.constant 0 : i32
    return %arg0, %c0_i32, %arg1, %c0_i32_0 : i32, i32, i32, i32
  }
  func.func @transform_1(%arg0: i32, %arg1: i32) -> (i32, i32, i32) {
    %c0_i32 = arith.constant 0 : i32
    %c0_i32_0 = arith.constant 0 : i32
    return %arg0, %arg1, %c0_i32 : i32, i32, i32
  }
  func.func @transform_2(%arg0: i32, %arg1: i32) -> (i32, i32, i32) {
    %c0_i32 = arith.constant 0 : i32
    %c0_i32_0 = arith.constant 0 : i32
    return %arg0, %arg1, %c0_i32 : i32, i32, i32
  }
  func.func @transform_3(%arg0: i32, %arg1: i32) -> (i32, i32, i32, i32) {
    %c0_i32 = arith.constant 0 : i32
    %c0_i32_0 = arith.constant 0 : i32
    %c0_i32_1 = arith.constant 0 : i32
    %c0_i32_2 = arith.constant 0 : i32
    return %arg0, %c0_i32, %c0_i32_0, %c0_i32_1 : i32, i32, i32, i32
  }
}

</mosaic_0001>

<llo_original>
// kernel: tpu_custom_call.1
$region0: #{tpu_custom_call.1}
  #allocation0 [shape = 'u32[]', space=smem, size = 0x4, offset = 0x4, fixed_abs, tag = 'smem constant byte address 0x4 - core index']
  #allocation1 [shape = 'u32[144,128]{1,0:T(1,128)}', space=vmem, size = 0x12000, scoped, tag = 'internal scratch']
  #allocation2 [shape = 's32[1,256]{1,0:T(1,128)}', space=vmem, size = 0x400, scoped, tag = 'scratch operand']
  #allocation3 [shape = 'f32[1,256]{1,0:T(1,128)}', space=vmem, size = 0x400, scoped, tag = 'scratch operand']
  %s0 = inlined_call_operand.hbm [shape: f32[2,3,16,256], index: 0, kind: input, shape index: {}]
  %s1 = inlined_call_operand.hbm [shape: s32[2,16,256], index: 1, kind: input, shape index: {}]
  %s2 = inlined_call_operand.hbm [shape: f32[2,16,256], index: 2, kind: input, shape index: {}]
  %s3 = inlined_call_operand.hbm [shape: f32[2,3,8,256], index: 3, kind: output, shape index: {}]
  %s4 = sld [smem:[#allocation0]]
  $region61: #{tpu_custom_call.1} parent=0
    _
  %s6 = ssub.s32 1, %s4
  %s7 = scalar_select 0, %s6, %s4
  $region1: #{tpu_custom_call.1} parent=0
    #allocation4 [shape = 'u8[98304]{0}', space=vmem, size = 0x18000, scoped, tag = 'input window, operand 0']
    #allocation5 [shape = 's32[2]{0}', space=sflag, size = 0x8, scoped, tag = 'scoped memory for tpu_custom_call.1']
    #allocation6 [shape = 's32[2]{0}', space=sflag, size = 0x8, scoped, tag = 'scoped memory for tpu_custom_call.1']
    #allocation7 [shape = 'u8[32768]{0}', space=vmem, size = 0x8000, scoped, tag = 'input window, operand 1']
    #allocation8 [shape = 's32[2]{0}', space=sflag, size = 0x8, scoped, tag = 'scoped memory for tpu_custom_call.1']
    #allocation9 [shape = 'u8[32768]{0}', space=vmem, size = 0x8000, scoped, tag = 'input window, operand 2']
    #allocation10 [shape = 'u8[49152]{0}', space=vmem, size = 0xc000, scoped, tag = 'output window, operand 0']
    %8 = vsyncpa [#allocation5], 0
    %s9 = scalar_lea.sflag [#allocation5], 1
    %10 = vsyncpa %s9, 0
    %11 = vsyncpa [#allocation8], 0
    %s12 = scalar_lea.sflag [#allocation8], 1
    %13 = vsyncpa %s12, 0
    %14 = vsyncpa [#allocation6], 0
    %s15 = scalar_lea.sflag [#allocation6], 1
    %16 = vsyncpa %s15, 0
    loop: start=0, step=1, limit=4
    $region2: #{tpu_custom_call.1} parent=1 // loop_pre_header
      _
    $region3: #{tpu_custom_call.1} parent=1 // loop_header
      %s18 = sphi 0, %s22
      %p19 = scmp.ge.s32.totalorder %s18, 4
      %s25 = sphi 0, %s37
      %s26 = sphi 0, %s33
      %s27 = sphi 0, %s25
      %s28 = sphi 0, %s26
      %s29 = sphi 0, %s27
      %s30 = sphi 0, %s28
      %s42 = sphi 0, %s44
      %s45 = sphi 0, %s42
      %s46 = sphi 0, %s45
      %s62 = sphi 0, %s46
      %s70 = sphi 0, %s72
      %s73 = sphi 0, %s70
      %s74 = sphi 0, %s73
      %s90 = sphi 0, %s74
      %s98 = sphi 0, %s100
      %s101 = sphi 0, %s98
      %s102 = sphi 0, %s101
      %s118 = sphi 0, %s102
      %s124 = sphi 0, %s126
      %s127 = sphi 0, %s124
      %s128 = sphi 0, %s127
      %s144 = sphi 0, %s128
    $region4: #{tpu_custom_call.1} parent=1 // loop_header_branch
      %21 = sbr.rel (%p19) target = $region8
    $region5: #{tpu_custom_call.1} parent=1 // loop_body
      %s23 = ssub.s32 %s18, 1
      %s24 = ssub.s32 %s18, 2
      %s31 = sadd.s32 1, %s26
      %p32 = scmp.ge.s32.totalorder %s31, 1
      %s33 = scalar_select %p32, 0, %s31
      %s34 = sadd.s32 1, %s25
      %s35 = scalar_select %p32, %s34, %s25
      %p36 = scmp.ge.s32.totalorder %s35, 2
      %s37 = scalar_select %p36, 0, %s35
      %s38 = ssub.s32 %s25, %s37
      %s39 = ssub.s32 %s26, %s33
      %s40 = sor.u32 %s38, %s39
      %p41 = scmp.eq.s32.totalorder %s40, 0
      %s43 = sadd.s32 %s42, 1
      %s44 = scalar_select %p41, %s42, %s43
      %p47 = pneg %p41
      %p48 = scmp.eq.s32.totalorder %s18, 1
      %p49 = por %p47, %p48
      %p50 = scmp.ne.s32.totalorder %s42, %s45
      %p51 = scmp.eq.s32.totalorder %s18, 0
      %p52 = por %p50, %p51
      %p53 = scmp.ne.s32.totalorder %s42, %s45
      %p54 = scmp.eq.s32.totalorder %s23, 1
      %p55 = por %p53, %p54
      %p56 = scmp.ne.s32.totalorder %s45, %s46
      %p57 = scmp.eq.s32.totalorder %s23, 0
      %p58 = por %p56, %p57
      %p59 = scmp.ne.s32.totalorder %s45, %s46
      %p60 = scmp.eq.s32.totalorder %s24, 1
      %p61 = por %p59, %p60
      %p63 = scmp.ne.s32.totalorder %s46, %s62
      %p64 = scmp.eq.s32.totalorder %s24, 0
      %p65 = por %p63, %p64
      %s66 = ssub.s32 %s25, %s37
      %s67 = ssub.s32 %s26, %s33
      %s68 = sor.u32 %s66, %s67
      %p69 = scmp.eq.s32.totalorder %s68, 0
      %s71 = sadd.s32 %s70, 1
      %s72 = scalar_select %p69, %s70, %s71
      %p75 = pneg %p69
      %p76 = scmp.eq.s32.totalorder %s18, 1
      %p77 = por %p75, %p76
      %p78 = scmp.ne.s32.totalorder %s70, %s73
      %p79 = scmp.eq.s32.totalorder %s18, 0
      %p80 = por %p78, %p79
      %p81 = scmp.ne.s32.totalorder %s70, %s73
      %p82 = scmp.eq.s32.totalorder %s23, 1
      %p83 = por %p81, %p82
      %p84 = scmp.ne.s32.totalorder %s73, %s74
      %p85 = scmp.eq.s32.totalorder %s23, 0
      %p86 = por %p84, %p85
      %p87 = scmp.ne.s32.totalorder %s73, %s74
      %p88 = scmp.eq.s32.totalorder %s24, 1
      %p89 = por %p87, %p88
      %p91 = scmp.ne.s32.totalorder %s74, %s90
      %p92 = scmp.eq.s32.totalorder %s24, 0
      %p93 = por %p91, %p92
      %s94 = ssub.s32 %s25, %s37
      %s95 = ssub.s32 %s26, %s33
      %s96 = sor.u32 %s94, %s95
      %p97 = scmp.eq.s32.totalorder %s96, 0
      %s99 = sadd.s32 %s98, 1
      %s100 = scalar_select %p97, %s98, %s99
      %p103 = pneg %p97
      %p104 = scmp.eq.s32.totalorder %s18, 1
      %p105 = por %p103, %p104
      %p106 = scmp.ne.s32.totalorder %s98, %s101
      %p107 = scmp.eq.s32.totalorder %s18, 0
      %p108 = por %p106, %p107
      %p109 = scmp.ne.s32.totalorder %s98, %s101
      %p110 = scmp.eq.s32.totalorder %s23, 1
      %p111 = por %p109, %p110
      %p112 = scmp.ne.s32.totalorder %s101, %s102
      %p113 = scmp.eq.s32.totalorder %s23, 0
      %p114 = por %p112, %p113
      %p115 = scmp.ne.s32.totalorder %s101, %s102
      %p116 = scmp.eq.s32.totalorder %s24, 1
      %p117 = por %p115, %p116
      %p119 = scmp.ne.s32.totalorder %s102, %s118
      %p120 = scmp.eq.s32.totalorder %s24, 0
      %p121 = por %p119, %p120
      %s122 = ssub.s32 %s25, %s37
      %p123 = scmp.eq.s32.totalorder %s122, 0
      %s125 = sadd.s32 %s124, 1
      %s126 = scalar_select %p123, %s124, %s125
      %p129 = pneg %p123
      %p130 = scmp.eq.s32.totalorder %s18, 1
      %p131 = por %p129, %p130
      %p132 = scmp.ne.s32.totalorder %s124, %s127
      %p133 = scmp.eq.s32.totalorder %s18, 0
      %p134 = por %p132, %p133
      %p135 = scmp.ne.s32.totalorder %s124, %s127
      %p136 = scmp.eq.s32.totalorder %s23, 1
      %p137 = por %p135, %p136
      %p138 = scmp.ne.s32.totalorder %s127, %s128
      %p139 = scmp.eq.s32.totalorder %s23, 0
      %p140 = por %p138, %p139
      %p141 = scmp.ne.s32.totalorder %s127, %s128
      %p142 = scmp.eq.s32.totalorder %s24, 1
      %p143 = por %p141, %p142
      %p145 = scmp.ne.s32.totalorder %s128, %s144
      %p146 = scmp.eq.s32.totalorder %s24, 0
      %p147 = por %p145, %p146
      %p148 = scmp.le.s32.totalorder 1, %s18
      %p149 = scmp.lt.s32.totalorder %s18, 3
      %p150 = pnand %p148, %p149
      %p151 = pneg %p150
      // Predicated region
      $region9: #{tpu_custom_call.1} parent=5 // pred_check
        _
      $region10: #{tpu_custom_call.1} parent=5 // pred_check_branch
        %153 = sbr.rel (%p150) target = $region12
      $region11: #{tpu_custom_call.1} parent=5 // pred_region
        %s154 = ssub.s32 %s18, 1
      $region12: #{tpu_custom_call.1} parent=5 // pred_fallthru
        _
      %p155 = scmp.lt.s32.totalorder %s18, 2
      // Predicated region
      $region13: #{tpu_custom_call.1} parent=5 // pred_check
        %p156 = pneg %p155
      $region14: #{tpu_custom_call.1} parent=5 // pred_check_branch
        %158 = sbr.rel (%p156) target = $region16
      $region15: #{tpu_custom_call.1} parent=5 // pred_region
        // Predicated region
        $region17: #{tpu_custom_call.1} parent=15 // pred_check
          %p159 = pneg %p52
        $region18: #{tpu_custom_call.1} parent=15 // pred_check_branch
          %161 = sbr.rel (%p159) target = $region20
        $region19: #{tpu_custom_call.1} parent=15 // pred_region
          %s162 = sand.u32 %s42, 1
          %s163 = scalar_lea.sflag [#allocation5], %s162
          %s164 = sand.u32 %s42, 1
          %s165 = smul.addr %s164, 96
          %s166 = scalar_lea.vmem [#allocation4], %s165
          %s167 = smul.u32 2, %s26
          %s169 = ssub.s32 1536, 1536
          %170 = vsyncadd %s163, %s169
          %s171 = smul.addr %s167, 2
          %s172 = smul.addr %s25, 12
          %s173 = sadd.s32 %s171, %s172
          %s174 = smul.addr %s173, 128
          %s175 = scalar_lea.hbm %s0, %s174
          %s176 = sshll.u32 %s166, 4
          %s177 = int_to_ptr.vmem [resolvable:$true] %s176
          %182 = dma.hbm_to_vmem [thread:$0]  %s175, 1536, %s177, %s163, 256, 256, 16
        $region20: #{tpu_custom_call.1} parent=15 // pred_fallthru
          _
        // Predicated region
        $region21: #{tpu_custom_call.1} parent=15 // pred_check
          %p183 = pneg %p80
        $region22: #{tpu_custom_call.1} parent=15 // pred_check_branch
          %185 = sbr.rel (%p183) target = $region24
        $region23: #{tpu_custom_call.1} parent=15 // pred_region
          %s186 = sand.u32 %s18, 1
          %s187 = scalar_lea.sflag [#allocation8], %s186
          %s188 = sand.u32 %s70, 1
          %s189 = smul.addr %s188, 32
          %s190 = scalar_lea.vmem [#allocation7], %s189
          %s191 = smul.u32 2, %s26
          %s193 = ssub.s32 512, 512
          %194 = vsyncadd %s187, %s193
          %s195 = smul.addr %s191, 2
          %s196 = smul.addr %s25, 4
          %s197 = sadd.s32 %s195, %s196
          %s198 = smul.addr %s197, 128
          %s199 = scalar_lea.hbm %s1, %s198
          %s200 = sshll.u32 %s190, 4
          %s201 = int_to_ptr.vmem [resolvable:$true] %s200
          %206 = dma.hbm_to_vmem [thread:$0]  %s199, 512, %s201, %s187, 256, 256, 16
        $region24: #{tpu_custom_call.1} parent=15 // pred_fallthru
          _
        // Predicated region
        $region25: #{tpu_custom_call.1} parent=15 // pred_check
          %p207 = pneg %p108
        $region26: #{tpu_custom_call.1} parent=15 // pred_check_branch
          %209 = sbr.rel (%p207) target = $region28
        $region27: #{tpu_custom_call.1} parent=15 // pred_region
          %s210 = sand.u32 %s18, 1
          %s211 = scalar_lea.sflag [#allocation8], %s210
          %s212 = sand.u32 %s98, 1
          %s213 = smul.addr %s212, 32
          %s214 = scalar_lea.vmem [#allocation9], %s213
          %s215 = smul.u32 2, %s26
          %s217 = ssub.s32 512, 512
          %218 = vsyncadd %s211, %s217
          %s219 = smul.addr %s215, 2
          %s220 = smul.addr %s25, 4
          %s221 = sadd.s32 %s219, %s220
          %s222 = smul.addr %s221, 128
          %s223 = scalar_lea.hbm %s2, %s222
          %s224 = sshll.u32 %s214, 4
          %s225 = int_to_ptr.vmem [resolvable:$true] %s224
          %230 = dma.hbm_to_vmem [thread:$0]  %s223, 512, %s225, %s211, 256, 256, 16
        $region28: #{tpu_custom_call.1} parent=15 // pred_fallthru
          _
      $region16: #{tpu_custom_call.1} parent=5 // pred_fallthru
        _
      %p231 = scmp.le.s32.totalorder 1, %s18
      %p232 = scmp.lt.s32.totalorder %s18, 3
      %p233 = pnand %p231, %p232
      %p234 = pneg %p233
      // Predicated region
      $region29: #{tpu_custom_call.1} parent=5 // pred_check
        _
      $region30: #{tpu_custom_call.1} parent=5 // pred_check_branch
        %236 = sbr.rel (%p233) target = $region32
      $region31: #{tpu_custom_call.1} parent=5 // pred_region
        %s237 = ssub.s32 %s18, 1
        %s238 = sand.u32 %s45, 1
        %s239 = scalar_lea.sflag [#allocation5], %s238
        %s240 = sand.u32 %s45, 1
        %s241 = smul.addr %s240, 96
        %s242 = scalar_lea.vmem [#allocation4], %s241
        // Predicated region
        $region33: #{tpu_custom_call.1} parent=31 // pred_check
          %p243 = pneg %p58
        $region34: #{tpu_custom_call.1} parent=31 // pred_check_branch
          %245 = sbr.rel (%p243) target = $region36
        $region35: #{tpu_custom_call.1} parent=31 // pred_region
          %246 = dma.done %s239, 1536
        $region36: #{tpu_custom_call.1} parent=31 // pred_fallthru
          _
        %s247 = sand.u32 %s23, 1
        %s248 = scalar_lea.sflag [#allocation8], %s247
        %s249 = sand.u32 %s73, 1
        %s250 = smul.addr %s249, 32
        %s251 = scalar_lea.vmem [#allocation7], %s250
        // Predicated region
        $region37: #{tpu_custom_call.1} parent=31 // pred_check
          %p252 = pneg %p86
        $region38: #{tpu_custom_call.1} parent=31 // pred_check_branch
          %254 = sbr.rel (%p252) target = $region40
        $region39: #{tpu_custom_call.1} parent=31 // pred_region
          %255 = dma.done %s248, 512
        $region40: #{tpu_custom_call.1} parent=31 // pred_fallthru
          _
        %s256 = sand.u32 %s23, 1
        %s257 = scalar_lea.sflag [#allocation8], %s256
        %s258 = sand.u32 %s101, 1
        %s259 = smul.addr %s258, 32
        %s260 = scalar_lea.vmem [#allocation9], %s259
        // Predicated region
        $region41: #{tpu_custom_call.1} parent=31 // pred_check
          %p261 = pneg %p114
        $region42: #{tpu_custom_call.1} parent=31 // pred_check_branch
          %263 = sbr.rel (%p261) target = $region44
        $region43: #{tpu_custom_call.1} parent=31 // pred_region
          %264 = dma.done %s257, 512
        $region44: #{tpu_custom_call.1} parent=31 // pred_fallthru
          _
        %s265 = sand.u32 %s45, 1
        %s266 = scalar_lea.sflag [#allocation5], %s265
        %s267 = sand.u32 %s45, 1
        %s268 = smul.addr %s267, 96
        %s269 = scalar_lea.vmem [#allocation4], %s268
        %p270 = pneg %p58
        %p271 = pneg %p55
        %s272 = sand.u32 %s23, 1
        %s273 = scalar_lea.sflag [#allocation8], %s272
        %s274 = sand.u32 %s73, 1
        %s275 = smul.addr %s274, 32
        %s276 = scalar_lea.vmem [#allocation7], %s275
        %p277 = pneg %p86
        %p278 = pneg %p83
        %s279 = sand.u32 %s23, 1
        %s280 = scalar_lea.sflag [#allocation8], %s279
        %s281 = sand.u32 %s101, 1
        %s282 = smul.addr %s281, 32
        %s283 = scalar_lea.vmem [#allocation9], %s282
        %p284 = pneg %p114
        %p285 = pneg %p111
        %p286 = pneg %p140
        %p287 = pneg %p137
        %s288 = sand.u32 %s127, 1
        %s289 = scalar_lea.sflag [#allocation6], %s288
        %s290 = sand.u32 %s127, 1
        %s291 = smul.addr %s290, 48
        %s292 = scalar_lea.vmem [#allocation10], %s291
        %s293 = smul.u32 2, %s28
        %s294 = smul.u32 2, %s28
        %s295 = smul.u32 2, %s28
        %p296 = scmp.eq.s32.totalorder %s28, 0
        // Predicated region
        $region45: #{tpu_custom_call.1} parent=31 // pred_check
          %p297 = pneg %p296
        $region46: #{tpu_custom_call.1} parent=31 // pred_check_branch
          %299 = sbr.rel (%p297) target = $region48
        $region47: #{tpu_custom_call.1} parent=31 // pred_region
          %300 = vst [vmem:[%s292] sm:$0xff] 0.0
          %301 = vst [vmem:[%s292 + $0x8] sm:$0xff] 0.0
          %302 = vst [vmem:[%s292 + $0x10] sm:$0xff] 0.0
          %303 = vst [vmem:[%s292 + $0x18] sm:$0xff] 0.0
          %304 = vst [vmem:[%s292 + $0x20] sm:$0xff] 0.0
          %305 = vst [vmem:[%s292 + $0x28] sm:$0xff] 0.0
        $region48: #{tpu_custom_call.1} parent=31 // pred_fallthru
          _
        %v306 = vld [vmem:[%s251] sm:$0xff]
        %v307 = vld [vmem:[%s251 + $0x8] sm:$0xff]
        %v308 = vld [vmem:[%s251 + $0x10] sm:$0xff]
        %v309 = vld [vmem:[%s251 + $0x18] sm:$0xff]
        %v310 = vld [vmem:[%s260] sm:$0xff]
        %v311 = vld [vmem:[%s260 + $0x8] sm:$0xff]
        %v312 = vld [vmem:[%s260 + $0x10] sm:$0xff]
        %v313 = vld [vmem:[%s260 + $0x18] sm:$0xff]
        %v314 = vld [vmem:[#allocation2] sm:$0x3]
        %v315 = vld [vmem:[#allocation3] sm:$0x3]
        %v316 = vlaneseq
        %v317 = vshrl.u32 %v316, 7
        %v318 = vadd.s32 %v317, 8
        %v319 = vlaneseq
        %v320 = vand.u32 %v319, 127
        %v321 = vadd.s32 %v320, 128
        %s322 = smul.u32 %s28, 16
        %v323 = vstv %s322
        %v324 = vadd.s32 %v323, %v317
        %v325 = vadd.s32 %v323, %v318
        %vm326 = vcmp.lt.s32.totalorder %v320, 0
        %v327 = vsub.s32 0, %v320
        %v328 = vsel %vm326, %v327, %v320
        %v329 = vshrl.u32 %v328, 4
        %v330 = vand.u32 %v328, 15
        %v331 = vsub.s32 0, %v330
        %v332 = vsel %vm326, %v331, %v330
        %vm333 = vcmp.lt.s32.totalorder %v321, 0
        %v334 = vsub.s32 0, %v321
        %v335 = vsel %vm333, %v334, %v321
        %v336 = vshrl.u32 %v335, 4
        %v337 = vand.u32 %v335, 15
        %v338 = vsub.s32 0, %v337
        %v339 = vsel %vm333, %v338, %v337
        %vm340 = vcmp.ne.s32.totalorder %v332, 0
        %vm341 = vcmp.ne.s32.totalorder %v339, 0
        %vm342 = vcmp.lt.s32.totalorder %v332, 0
        %vm343 = vcmp.lt.s32.totalorder %v339, 0
        %vm344 = vmand %vm342, %vm340
        %vm345 = vmand %vm343, %vm341
        %v346 = vadd.s32 %v332, 16
        %v347 = vadd.s32 %v339, 16
        %v348 = vsel %vm344, %v346, %v332
        %v349 = vsel %vm345, %v347, %v339
        %vm350 = vcmp.lt.s32.totalorder %v324, 16
        %vm351 = vcmp.lt.s32.totalorder %v325, 16
        %v352 = vlaneseq
        %v353 = vshrl.u32 %v352, 7
        %v354 = vsub.s32 0, %v353
        %v355 = vrot.slane %v314, %v354
        %v356 = vlaneseq
        %v357 = vshrl.u32 %v356, 7
        %v358 = vsub.s32 1, %v357
        %v359 = vrot.slane %v314, %v358
        %vm360 = vcmask 1040384
        %v361 = vrot.slane %v306, 7
        %v362 = vrot.slane %v307, 7
        %v363 = vrot.slane %v308, 7
        %v364 = vsel %vm360, %v361, %v363
        %v365 = vrot.slane %v309, 7
        %v366 = vsel %vm360, %v362, %v365
        %v367 = vsel %vm360, %v355, %v361
        %v368 = vsel %vm360, %v359, %v362
        %v370 = vlaneseq
        %v371 = vshrl.u32 %v370, 7
        %v372 = vsub.s32 0, %v371
        %v373 = vrot.slane %v315, %v372
        %v374 = vlaneseq
        %v375 = vshrl.u32 %v374, 7
        %v376 = vsub.s32 1, %v375
        %v377 = vrot.slane %v315, %v376
        %v384 = vrot.slane %v310, 7
        %v385 = vrot.slane %v311, 7
        %v386 = vrot.slane %v312, 7
        %v387 = vsel %vm360, %v384, %v386
        %v388 = vrot.slane %v313, 7
        %v389 = vsel %vm360, %v385, %v388
        %v394 = vsel %vm360, %v373, %v384
        %v395 = vsel %vm360, %v377, %v385
        %vm396 = vcmp.ge.s32.totalorder %v324, 1
        %vm397 = vcmp.ge.s32.totalorder %v325, 1
        %vm398 = vmand %vm350, %vm396
        %vm399 = vmand %vm351, %vm397
        %v400 = vld [vmem:[%s242] sm:$0xff]
        %v401 = vld [vmem:[%s242 + $0x8] sm:$0xff]
        %v402 = vld [vmem:[%s242 + $0x10] sm:$0xff]
        %v403 = vld [vmem:[%s242 + $0x18] sm:$0xff]
        %vm404 = vcmp.eq.s32.totalorder %v306, %v367
        %vm405 = vcmp.eq.s32.totalorder %v307, %v368
        %vm406 = vcmp.eq.s32.totalorder %v308, %v364
        %vm407 = vcmp.eq.s32.totalorder %v309, %v366
        %vm408 = vcmp.ne.s32.totalorder %v306, 0
        %vm409 = vcmp.ne.s32.totalorder %v307, 0
        %vm410 = vcmp.ne.s32.totalorder %v308, 0
        %vm411 = vcmp.ne.s32.totalorder %v309, 0
        %vm412 = vmand %vm404, %vm408
        %vm413 = vmand %vm405, %vm409
        %vm414 = vmand %vm406, %vm410
        %vm415 = vmand %vm407, %vm411
        %vm416 = vcmp.eq.f32.partialorder %v310, %v394
        %vm417 = vcmp.eq.f32.partialorder %v311, %v395
        %vm418 = vcmp.eq.f32.partialorder %v312, %v387
        %vm419 = vcmp.eq.f32.partialorder %v313, %v389
        %vm420 = vcmp.ne.f32.partialorder %v310, 0.0
        %vm421 = vcmp.ne.f32.partialorder %v311, 0.0
        %vm422 = vcmp.ne.f32.partialorder %v312, 0.0
        %vm423 = vcmp.ne.f32.partialorder %v313, 0.0
        %vm424 = vmand %vm416, %vm420
        %vm425 = vmand %vm417, %vm421
        %vm426 = vmand %vm418, %vm422
        %vm427 = vmand %vm419, %vm423
        %v428 = vmax.f32 %v400, 0.0
        %v429 = vmax.f32 %v401, 0.0
        %v430 = vmax.f32 %v402, 0.0
        %v431 = vmax.f32 %v403, 0.0
        %v432 = vsel %vm412, %v400, 0.0
        %v433 = vsel %vm413, %v401, 0.0
        %v434 = vsel %vm414, %v402, 0.0
        %v435 = vsel %vm415, %v403, 0.0
        %v436 = vsub.f32 %v428, %v432
        %v437 = vsub.f32 %v429, %v433
        %v438 = vsub.f32 %v430, %v434
        %v439 = vsub.f32 %v431, %v435
        %v440 = vand.u32 2147483647, %v400
        %v441 = vand.u32 2147483647, %v401
        %v442 = vand.u32 2147483647, %v402
        %v443 = vand.u32 2147483647, %v403
        %v444 = vsub.f32 0.0, %v440
        %v445 = vsub.f32 0.0, %v441
        %v446 = vsub.f32 0.0, %v442
        %v447 = vsub.f32 0.0, %v443
        %v448 = vmul.f32 %v444, 1.442695
        %v449 = vpow.pop %v448
        %v450 = vmul.f32 %v445, 1.442695
        %v451 = vpow.pop %v450
        %v452 = vmul.f32 %v446, 1.442695
        %v453 = vpow.pop %v452
        %v454 = vmul.f32 %v447, 1.442695
        %v455 = vpow.pop %v454
        %v456 = vadd.f32 %v449, 1.0
        %v457 = vlog2.pop %v456
        %v458 = vmul.f32 %v457, 0.6931472
        %v459 = vmul.f32 -0.5, %v449
        %v460 = vadd.f32 %v459, 1.0
        %v461 = vmul.f32 %v460, %v449
        %v462 = vand.u32 2147483647, %v449
        %vm463 = vcmp.lt.f32.partialorder %v462, 0.0004427343
        %v464 = vsel %vm463, %v461, %v458
        %v465 = vadd.f32 %v451, 1.0
        %v466 = vlog2.pop %v465
        %v467 = vmul.f32 %v466, 0.6931472
        %v468 = vmul.f32 -0.5, %v451
        %v469 = vadd.f32 %v468, 1.0
        %v470 = vmul.f32 %v469, %v451
        %v471 = vand.u32 2147483647, %v451
        %vm472 = vcmp.lt.f32.partialorder %v471, 0.0004427343
        %v473 = vsel %vm472, %v470, %v467
        %v474 = vadd.f32 %v453, 1.0
        %v475 = vlog2.pop %v474
        %v476 = vmul.f32 %v475, 0.6931472
        %v477 = vmul.f32 -0.5, %v453
        %v478 = vadd.f32 %v477, 1.0
        %v479 = vmul.f32 %v478, %v453
        %v480 = vand.u32 2147483647, %v453
        %vm481 = vcmp.lt.f32.partialorder %v480, 0.0004427343
        %v482 = vsel %vm481, %v479, %v476
        %v483 = vadd.f32 %v455, 1.0
        %v484 = vlog2.pop %v483
        %v485 = vmul.f32 %v484, 0.6931472
        %v486 = vmul.f32 -0.5, %v455
        %v487 = vadd.f32 %v486, 1.0
        %v488 = vmul.f32 %v487, %v455
        %v489 = vand.u32 2147483647, %v455
        %vm490 = vcmp.lt.f32.partialorder %v489, 0.0004427343
        %v491 = vsel %vm490, %v488, %v485
        %v492 = vadd.f32 %v436, %v464
        %v493 = vadd.f32 %v437, %v473
        %v494 = vadd.f32 %v438, %v482
        %v495 = vadd.f32 %v439, %v491
        %v496 = vsel %vm424, 1.0, 0.5
        %v497 = vsel %vm425, 1.0, 0.5
        %v498 = vsel %vm426, 1.0, 0.5
        %v499 = vsel %vm427, 1.0, 0.5
        %v500 = vmul.f32 %v492, %v496
        %v501 = vmul.f32 %v493, %v497
        %v502 = vmul.f32 %v494, %v498
        %v503 = vmul.f32 %v495, %v499
        %v504 = vsel %vm398, %v500, 0.0
        %v505 = vsel %vm398, %v501, 0.0
        %v506 = vsel %vm399, %v502, 0.0
        %v507 = vsel %vm399, %v503, 0.0
        %v508 = vld [vmem:[%s292] sm:$0xff]
        %v509 = vld [vmem:[%s292 + $0x8] sm:$0xff]
        %v510 = vadd.f32 %v504, %v506
        %v511 = vadd.f32 %v505, %v507
        %v512 = vadd.f32 %v508, %v510
        %v513 = vadd.f32 %v509, %v511
        %514 = vst [vmem:[%s292] sm:$0xff] %v512
        %515 = vst [vmem:[%s292 + $0x8] sm:$0xff] %v513
        %516 = vrot.lane.b32.xlu0 %v307, 16
        %v517 = vpop.permute.xlu0 %516
        %518 = vrot.lane.b32.xlu0 %v309, 16
        %v519 = vpop.permute.xlu0 %518
        %520 = vrot.lane.b32.xlu0 %v306, 16
        %v521 = vpop.permute.xlu0 %520
        %522 = vrot.lane.b32.xlu0 %v308, 16
        %v523 = vpop.permute.xlu0 %522
        %vm524 = vcmask 130048
        %v525 = vsel %vm524, %v521, %v517
        %v526 = vsel %vm524, %v523, %v519
        %v527 = vsel %vm524, %v517, %v521
        %v528 = vsel %vm524, %v519, %v523
        %529 = vrot.lane.b32.xlu0 %v311, 16
        %v530 = vpop.permute.xlu0 %529
        %531 = vrot.lane.b32.xlu0 %v313, 16
        %v532 = vpop.permute.xlu0 %531
        %535 = vrot.lane.b32.xlu0 %v310, 16
        %v536 = vpop.permute.xlu0 %535
        %537 = vrot.lane.b32.xlu0 %v312, 16
        %v538 = vpop.permute.xlu0 %537
        %v539 = vsel %vm524, %v536, %v530
        %v540 = vsel %vm524, %v538, %v532
        %v545 = vsel %vm524, %v530, %v536
        %v546 = vsel %vm524, %v532, %v538
        %vm547 = vcmp.ge.s32.totalorder %v320, 16
        %vm548 = vcmp.ge.s32.totalorder %v321, 16
        %vm549 = vmand %vm350, %vm547
        %vm550 = vmand %vm350, %vm548
        %vm551 = vmand %vm351, %vm547
        %vm552 = vmand %vm351, %vm548
        %s553 = scalar_lea.vmem %s242, 32 [#allocation4]
        %v554 = vld [vmem:[%s553] sm:$0xff]
        %v555 = vld [vmem:[%s553 + $0x8] sm:$0xff]
        %v556 = vld [vmem:[%s553 + $0x10] sm:$0xff]
        %v557 = vld [vmem:[%s553 + $0x18] sm:$0xff]
        %vm558 = vcmp.eq.s32.totalorder %v306, %v527
        %vm559 = vcmp.eq.s32.totalorder %v307, %v525
        %vm560 = vcmp.eq.s32.totalorder %v308, %v528
        %vm561 = vcmp.eq.s32.totalorder %v309, %v526
        %vm562 = vmand %vm558, %vm408
        %vm563 = vmand %vm559, %vm409
        %vm564 = vmand %vm560, %vm410
        %vm565 = vmand %vm561, %vm411
        %vm566 = vcmp.eq.f32.partialorder %v310, %v545
        %vm567 = vcmp.eq.f32.partialorder %v311, %v539
        %vm568 = vcmp.eq.f32.partialorder %v312, %v546
        %vm569 = vcmp.eq.f32.partialorder %v313, %v540
        %vm570 = vmand %vm566, %vm420
        %vm571 = vmand %vm567, %vm421
        %vm572 = vmand %vm568, %vm422
        %vm573 = vmand %vm569, %vm423
        %v574 = vmax.f32 %v554, 0.0
        %v575 = vmax.f32 %v555, 0.0
        %v576 = vmax.f32 %v556, 0.0
        %v577 = vmax.f32 %v557, 0.0
        %v578 = vsel %vm562, %v554, 0.0
        %v579 = vsel %vm563, %v555, 0.0
        %v580 = vsel %vm564, %v556, 0.0
        %v581 = vsel %vm565, %v557, 0.0
        %v582 = vsub.f32 %v574, %v578
        %v583 = vsub.f32 %v575, %v579
        %v584 = vsub.f32 %v576, %v580
        %v585 = vsub.f32 %v577, %v581
        %v586 = vand.u32 2147483647, %v554
        %v587 = vand.u32 2147483647, %v555
        %v588 = vand.u32 2147483647, %v556
        %v589 = vand.u32 2147483647, %v557
        %v590 = vsub.f32 0.0, %v586
        %v591 = vsub.f32 0.0, %v587
        %v592 = vsub.f32 0.0, %v588
        %v593 = vsub.f32 0.0, %v589
        %v594 = vmul.f32 %v590, 1.442695
        %v595 = vpow.pop %v594
        %v596 = vmul.f32 %v591, 1.442695
        %v597 = vpow.pop %v596
        %v598 = vmul.f32 %v592, 1.442695
        %v599 = vpow.pop %v598
        %v600 = vmul.f32 %v593, 1.442695
        %v601 = vpow.pop %v600
        %v602 = vadd.f32 %v595, 1.0
        %v603 = vlog2.pop %v602
        %v604 = vmul.f32 %v603, 0.6931472
        %v605 = vmul.f32 -0.5, %v595
        %v606 = vadd.f32 %v605, 1.0
        %v607 = vmul.f32 %v606, %v595
        %v608 = vand.u32 2147483647, %v595
        %vm609 = vcmp.lt.f32.partialorder %v608, 0.0004427343
        %v610 = vsel %vm609, %v607, %v604
        %v611 = vadd.f32 %v597, 1.0
        %v612 = vlog2.pop %v611
        %v613 = vmul.f32 %v612, 0.6931472
        %v614 = vmul.f32 -0.5, %v597
        %v615 = vadd.f32 %v614, 1.0
        %v616 = vmul.f32 %v615, %v597
        %v617 = vand.u32 2147483647, %v597
        %vm618 = vcmp.lt.f32.partialorder %v617, 0.0004427343
        %v619 = vsel %vm618, %v616, %v613
        %v620 = vadd.f32 %v599, 1.0
        %v621 = vlog2.pop %v620
        %v622 = vmul.f32 %v621, 0.6931472
        %v623 = vmul.f32 -0.5, %v599
        %v624 = vadd.f32 %v623, 1.0
        %v625 = vmul.f32 %v624, %v599
        %v626 = vand.u32 2147483647, %v599
        %vm627 = vcmp.lt.f32.partialorder %v626, 0.0004427343
        %v628 = vsel %vm627, %v625, %v622
        %v629 = vadd.f32 %v601, 1.0
        %v630 = vlog2.pop %v629
        %v631 = vmul.f32 %v630, 0.6931472
        %v632 = vmul.f32 -0.5, %v601
        %v633 = vadd.f32 %v632, 1.0
        %v634 = vmul.f32 %v633, %v601
        %v635 = vand.u32 2147483647, %v601
        %vm636 = vcmp.lt.f32.partialorder %v635, 0.0004427343
        %v637 = vsel %vm636, %v634, %v631
        %v638 = vadd.f32 %v582, %v610
        %v639 = vadd.f32 %v583, %v619
        %v640 = vadd.f32 %v584, %v628
        %v641 = vadd.f32 %v585, %v637
        %v642 = vsel %vm570, 1.0, 0.5
        %v643 = vsel %vm571, 1.0, 0.5
        %v644 = vsel %vm572, 1.0, 0.5
        %v645 = vsel %vm573, 1.0, 0.5
        %v646 = vmul.f32 %v638, %v642
        %v647 = vmul.f32 %v639, %v643
        %v648 = vmul.f32 %v640, %v644
        %v649 = vmul.f32 %v641, %v645
        %v650 = vsel %vm549, %v646, 0.0
        %v651 = vsel %vm550, %v647, 0.0
        %v652 = vsel %vm551, %v648, 0.0
        %v653 = vsel %vm552, %v649, 0.0
        %s654 = scalar_lea.vmem %s292, 16 [#allocation10]
        %v655 = vld [vmem:[%s654] sm:$0xff]
        %v656 = vld [vmem:[%s654 + $0x8] sm:$0xff]
        %v657 = vadd.f32 %v650, %v652
        %v658 = vadd.f32 %v651, %v653
        %v659 = vadd.f32 %v655, %v657
        %v660 = vadd.f32 %v656, %v658
        %661 = vst [vmem:[%s654] sm:$0xff] %v659
        %662 = vst [vmem:[%s654 + $0x8] sm:$0xff] %v660
        %663 = vrot.lane.b32.xlu0 %v307, 1
        %v664 = vpop.permute.xlu0 %663
        %665 = vrot.lane.b32.xlu0 %v309, 1
        %v666 = vpop.permute.xlu0 %665
        %667 = vrot.lane.b32.xlu0 %v306, 1
        %v668 = vpop.permute.xlu0 %667
        %669 = vrot.lane.b32.xlu0 %v308, 1
        %v670 = vpop.permute.xlu0 %669
        %vm671 = vcmask 7168
        %v672 = vsel %vm671, %v668, %v664
        %v673 = vsel %vm671, %v670, %v666
        %v674 = vsel %vm671, %v664, %v668
        %v675 = vsel %vm671, %v666, %v670
        %676 = vrot.lane.b32.xlu0 %v311, 1
        %v677 = vpop.permute.xlu0 %676
        %678 = vrot.lane.b32.xlu0 %v313, 1
        %v679 = vpop.permute.xlu0 %678
        %682 = vrot.lane.b32.xlu0 %v310, 1
        %v683 = vpop.permute.xlu0 %682
        %684 = vrot.lane.b32.xlu0 %v312, 1
        %v685 = vpop.permute.xlu0 %684
        %v686 = vsel %vm671, %v683, %v677
        %v687 = vsel %vm671, %v685, %v679
        %v692 = vsel %vm671, %v677, %v683
        %v693 = vsel %vm671, %v679, %v685
        %vm694 = vcmp.ge.s32.totalorder %v348, 1
        %vm695 = vcmp.ge.s32.totalorder %v349, 1
        %vm696 = vmand %vm350, %vm694
        %vm697 = vmand %vm350, %vm695
        %vm698 = vmand %vm351, %vm694
        %vm699 = vmand %vm351, %vm695
        %s700 = scalar_lea.vmem %s242, 64 [#allocation4]
        %v701 = vld [vmem:[%s700] sm:$0xff]
        %v702 = vld [vmem:[%s700 + $0x8] sm:$0xff]
        %v703 = vld [vmem:[%s700 + $0x10] sm:$0xff]
        %v704 = vld [vmem:[%s700 + $0x18] sm:$0xff]
        %vm705 = vcmp.eq.s32.totalorder %v306, %v674
        %vm706 = vcmp.eq.s32.totalorder %v307, %v672
        %vm707 = vcmp.eq.s32.totalorder %v308, %v675
        %vm708 = vcmp.eq.s32.totalorder %v309, %v673
        %vm709 = vmand %vm705, %vm408
        %vm710 = vmand %vm706, %vm409
        %vm711 = vmand %vm707, %vm410
        %vm712 = vmand %vm708, %vm411
        %vm713 = vcmp.eq.f32.partialorder %v310, %v692
        %vm714 = vcmp.eq.f32.partialorder %v311, %v686
        %vm715 = vcmp.eq.f32.partialorder %v312, %v693
        %vm716 = vcmp.eq.f32.partialorder %v313, %v687
        %vm717 = vmand %vm713, %vm420
        %vm718 = vmand %vm714, %vm421
        %vm719 = vmand %vm715, %vm422
        %vm720 = vmand %vm716, %vm423
        %v721 = vmax.f32 %v701, 0.0
        %v722 = vmax.f32 %v702, 0.0
        %v723 = vmax.f32 %v703, 0.0
        %v724 = vmax.f32 %v704, 0.0
        %v725 = vsel %vm709, %v701, 0.0
        %v726 = vsel %vm710, %v702, 0.0
        %v727 = vsel %vm711, %v703, 0.0
        %v728 = vsel %vm712, %v704, 0.0
        %v729 = vsub.f32 %v721, %v725
        %v730 = vsub.f32 %v722, %v726
        %v731 = vsub.f32 %v723, %v727
        %v732 = vsub.f32 %v724, %v728
        %v733 = vand.u32 2147483647, %v701
        %v734 = vand.u32 2147483647, %v702
        %v735 = vand.u32 2147483647, %v703
        %v736 = vand.u32 2147483647, %v704
        %v737 = vsub.f32 0.0, %v733
        %v738 = vsub.f32 0.0, %v734
        %v739 = vsub.f32 0.0, %v735
        %v740 = vsub.f32 0.0, %v736
        %v741 = vmul.f32 %v737, 1.442695
        %v742 = vpow.pop %v741
        %v743 = vmul.f32 %v738, 1.442695
        %v744 = vpow.pop %v743
        %v745 = vmul.f32 %v739, 1.442695
        %v746 = vpow.pop %v745
        %v747 = vmul.f32 %v740, 1.442695
        %v748 = vpow.pop %v747
        %v749 = vadd.f32 %v742, 1.0
        %v750 = vlog2.pop %v749
        %v751 = vmul.f32 %v750, 0.6931472
        %v752 = vmul.f32 -0.5, %v742
        %v753 = vadd.f32 %v752, 1.0
        %v754 = vmul.f32 %v753, %v742
        %v755 = vand.u32 2147483647, %v742
        %vm756 = vcmp.lt.f32.partialorder %v755, 0.0004427343
        %v757 = vsel %vm756, %v754, %v751
        %v758 = vadd.f32 %v744, 1.0
        %v759 = vlog2.pop %v758
        %v760 = vmul.f32 %v759, 0.6931472
        %v761 = vmul.f32 -0.5, %v744
        %v762 = vadd.f32 %v761, 1.0
        %v763 = vmul.f32 %v762, %v744
        %v764 = vand.u32 2147483647, %v744
        %vm765 = vcmp.lt.f32.partialorder %v764, 0.0004427343
        %v766 = vsel %vm765, %v763, %v760
        %v767 = vadd.f32 %v746, 1.0
        %v768 = vlog2.pop %v767
        %v769 = vmul.f32 %v768, 0.6931472
        %v770 = vmul.f32 -0.5, %v746
        %v771 = vadd.f32 %v770, 1.0
        %v772 = vmul.f32 %v771, %v746
        %v773 = vand.u32 2147483647, %v746
        %vm774 = vcmp.lt.f32.partialorder %v773, 0.0004427343
        %v775 = vsel %vm774, %v772, %v769
        %v776 = vadd.f32 %v748, 1.0
        %v777 = vlog2.pop %v776
        %v778 = vmul.f32 %v777, 0.6931472
        %v779 = vmul.f32 -0.5, %v748
        %v780 = vadd.f32 %v779, 1.0
        %v781 = vmul.f32 %v780, %v748
        %v782 = vand.u32 2147483647, %v748
        %vm783 = vcmp.lt.f32.partialorder %v782, 0.0004427343
        %v784 = vsel %vm783, %v781, %v778
        %v785 = vadd.f32 %v729, %v757
        %v786 = vadd.f32 %v730, %v766
        %v787 = vadd.f32 %v731, %v775
        %v788 = vadd.f32 %v732, %v784
        %v789 = vsel %vm717, 1.0, 0.5
        %v790 = vsel %vm718, 1.0, 0.5
        %v791 = vsel %vm719, 1.0, 0.5
        %v792 = vsel %vm720, 1.0, 0.5
        %v793 = vmul.f32 %v785, %v789
        %v794 = vmul.f32 %v786, %v790
        %v795 = vmul.f32 %v787, %v791
        %v796 = vmul.f32 %v788, %v792
        %v797 = vsel %vm696, %v793, 0.0
        %v798 = vsel %vm697, %v794, 0.0
        %v799 = vsel %vm698, %v795, 0.0
        %v800 = vsel %vm699, %v796, 0.0
        %s801 = scalar_lea.vmem %s292, 32 [#allocation10]
        %v802 = vld [vmem:[%s801] sm:$0xff]
        %v803 = vld [vmem:[%s801 + $0x8] sm:$0xff]
        %v804 = vadd.f32 %v797, %v799
        %v805 = vadd.f32 %v798, %v800
        %v806 = vadd.f32 %v802, %v804
        %v807 = vadd.f32 %v803, %v805
        %808 = vst [vmem:[%s801] sm:$0xff] %v806
        %809 = vst [vmem:[%s801 + $0x8] sm:$0xff] %v807
        %v810 = vcombine.high %v308, %v309
        %v812 = vunpack.c.l.s4 1966171168
        %v813 = vunpack.c.0.s8 %v812
        %v814 = vlaneseq
        %v815 = vshrl.u32 %v814, 7
        %v816 = vsub.s32 %v813, %v815
        %v817 = vrot.slane %v810, %v816
        %v818 = vcombine.high %v817, %v817
        %v820 = vunpack.c.l.s4 1966171168
        %v821 = vunpack.c.0.s8 %v820
        %v822 = vlaneseq
        %v823 = vshrl.u32 %v822, 7
        %v824 = vsub.s32 %v821, %v823
        %v825 = vrot.slane %v818, %v824
        %v826 = vcombine.high %v825, %v825
        %v827 = vlaneseq
        %vm828 = vcmp.ge.s32.totalorder %v827, 0
        %vm829 = vcmp.lt.s32.totalorder %v827, 256
        %vm830 = vmand %vm828, %vm829
        %831 = vst.msk [vmem:[#allocation2] sm:$0x3] %vm830, %v826
        %v832 = vcombine.high %v312, %v313
        %v834 = vunpack.c.l.s4 1966171168
        %v835 = vunpack.c.0.s8 %v834
        %v836 = vlaneseq
        %v837 = vshrl.u32 %v836, 7
        %v838 = vsub.s32 %v835, %v837
        %v839 = vrot.slane %v832, %v838
        %v840 = vcombine.high %v839, %v839
        %v842 = vunpack.c.l.s4 1966171168
        %v843 = vunpack.c.0.s8 %v842
        %v844 = vlaneseq
        %v845 = vshrl.u32 %v844, 7
        %v846 = vsub.s32 %v843, %v845
        %v847 = vrot.slane %v840, %v846
        %v848 = vcombine.high %v847, %v847
        %850 = vst.msk [vmem:[#allocation3] sm:$0x3] %vm830, %v848
        %s851 = sand.u32 %s127, 1
        %s852 = scalar_lea.sflag [#allocation6], %s851
        %s853 = sand.u32 %s127, 1
        %s854 = smul.addr %s853, 48
        %s855 = scalar_lea.vmem [#allocation10], %s854
        // Predicated region
        $region49: #{tpu_custom_call.1} parent=31 // pred_check
          %p856 = pneg %p137
        $region50: #{tpu_custom_call.1} parent=31 // pred_check_branch
          %858 = sbr.rel (%p856) target = $region52
        $region51: #{tpu_custom_call.1} parent=31 // pred_region
          %s860 = ssub.s32 768, 768
          %861 = vsyncadd %s852, %s860
          %s862 = smul.addr %s27, 6
          %s863 = smul.addr %s862, 128
          %s864 = scalar_lea.hbm %s3, %s863
          %s865 = sshll.u32 %s855, 4
          %s866 = int_to_ptr.vmem [resolvable:$true] %s865
          %871 = dma.vmem_to_hbm [thread:$0]  %s866, 768, %s864, %s852, 256, 256, 16
        $region52: #{tpu_custom_call.1} parent=31 // pred_fallthru
          _
      $region32: #{tpu_custom_call.1} parent=5 // pred_fallthru
        _
      %p872 = scmp.le.s32.totalorder 2, %s18
      // Predicated region
      $region53: #{tpu_custom_call.1} parent=5 // pred_check
        %p873 = pneg %p872
      $region54: #{tpu_custom_call.1} parent=5 // pred_check_branch
        %875 = sbr.rel (%p873) target = $region56
      $region55: #{tpu_custom_call.1} parent=5 // pred_region
        %s876 = ssub.s32 %s18, 2
        // Predicated region
        $region57: #{tpu_custom_call.1} parent=55 // pred_check
          %p877 = pneg %p143
        $region58: #{tpu_custom_call.1} parent=55 // pred_check_branch
          %879 = sbr.rel (%p877) target = $region60
        $region59: #{tpu_custom_call.1} parent=55 // pred_region
          %s880 = sand.u32 %s128, 1
          %s881 = scalar_lea.sflag [#allocation6], %s880
          %s882 = sand.u32 %s128, 1
          %s883 = smul.addr %s882, 48
          %s884 = scalar_lea.vmem [#allocation10], %s883
          %885 = dma.done %s881, 768
        $region60: #{tpu_custom_call.1} parent=55 // pred_fallthru
          _
      $region56: #{tpu_custom_call.1} parent=5 // pred_fallthru
        _
    $region6: #{tpu_custom_call.1} parent=1 // loop_footer
      %s22 = sadd.s32 1, %s18
    $region7: #{tpu_custom_call.1} parent=1 // loop_footer_branch
      %17 = sbr.rel target = $region3
    $region8: #{tpu_custom_call.1} parent=1 // loop_exit
      _
    %886 = vsyncpa [#allocation5], 1
    %s887 = scalar_lea.sflag [#allocation5], 1
    %888 = vsyncpa %s887, 1
    %889 = vsyncpa [#allocation8], 1
    %s890 = scalar_lea.sflag [#allocation8], 1
    %891 = vsyncpa %s890, 1
    %892 = vsyncpa [#allocation6], 1
    %s893 = scalar_lea.sflag [#allocation6], 1
    %894 = vsyncpa %s893, 1

</llo_original>
